<compile_context>
chip_gen: v7x
topology: tpu7x:2x2x1
jax: 0.10.0
libtpu: 0.0.40
codegen_flags: <defaults>
</compile_context>

<pallas_src>
import functools

import jax
import jax.numpy as jnp
import numpy as np
from jax.experimental import pallas as pl
from jax.experimental.pallas import tpu as pltpu

_LANES = 128


def _contrastive_kernel(x_ref, y_ref, lab_ref, o_ref,
                        dot_acc, x2_acc, y2_acc, *, margin, lane_groups):
    k = pl.program_id(1)

    @pl.when(k == 0)
    def _init():
        dot_acc[...] = jnp.zeros_like(dot_acc)
        x2_acc[...] = jnp.zeros_like(x2_acc)
        y2_acc[...] = jnp.zeros_like(y2_acc)

    # Hot path: VPU-only work on (tb, 128) lane slabs (static, lane-aligned
    # slices of the tile).  The cross-lane (XLU) reduce is deferred to the
    # finalize block so the inner loop stays DMA-bound even on v7x / bf16.
    xs = x_ref[:, 0:_LANES].astype(jnp.float32)
    ys = y_ref[:, 0:_LANES].astype(jnp.float32)
    d_part = xs * ys
    x_part = xs * xs
    y_part = ys * ys
    for c in range(1, lane_groups):            # static, unrolled
        lo = c * _LANES
        xs = x_ref[:, lo:lo + _LANES].astype(jnp.float32)
        ys = y_ref[:, lo:lo + _LANES].astype(jnp.float32)
        d_part = d_part + xs * ys
        x_part = x_part + xs * xs
        y_part = y_part + ys * ys

    dot_acc[...] += d_part
    x2_acc[...] += x_part
    y2_acc[...] += y_part

    # Finalize once per batch tile: single XLU reduce, cosine distance, loss.
    @pl.when(k == pl.num_programs(1) - 1)
    def _finalize():
        eps = jnp.float32(1e-8)
        dot = jnp.sum(dot_acc[...], axis=-1, keepdims=True)   # (tb, 1)
        x2 = jnp.sum(x2_acc[...], axis=-1, keepdims=True)
        y2 = jnp.sum(y2_acc[...], axis=-1, keepdims=True)
        # F.cosine_similarity clamps (||x||^2 * ||y||^2) at eps^2 before the
        # rsqrt (ATen semantics); sqrt is monotone so this matches the clamp
        # of the norm product at eps.
        denom2 = jnp.maximum(x2 * y2, eps * eps)
        cos = dot * jax.lax.rsqrt(denom2)
        dist = 1.0 - cos                                       # (tb, 1)
        lab = lab_ref[...].astype(jnp.float32)                 # (tb, 1), 0/1
        hinge = jnp.maximum(jnp.float32(margin) - dist, 0.0)
        o_ref[...] = 0.5 * (lab * dist * dist + (1.0 - lab) * hinge * hinge)


def _round_up(x, m):
    return ((x + m - 1) // m) * m


def _sublane_unit(dtype):
    """Sublane packing unit: 8 rows (f32), 16 (bf16/f16), 32 (int8/fp8)."""
    return {4: 8, 2: 16, 1: 32}.get(jnp.dtype(dtype).itemsize, 8)


def _pick_divisor_tile(dim, unit, cap):
    """Largest multiple of `unit` that divides `dim` and is <= cap.

    `dim` must already be a multiple of `unit`, so this always succeeds and
    never exceeds `cap` (deterministic VMEM budget)."""
    cap = max(unit, (min(cap, dim) // unit) * unit)
    t = cap
    while t > unit:
        if dim % t == 0:
            return t
        t -= unit
    return unit


def _tpu_config():
    """Generation-aware tile caps / VMEM limits (one code path, safe on all)."""
    kind = ""
    try:
        kind = jax.devices()[0].device_kind.lower()
    except Exception:
        pass
    if "v7" in kind:
        # 3.2 TB/s HBM: larger D tile amortizes the ~0.35us/step overhead;
        # 40 MiB stays well under the 64 MiB physical VMEM (inputs + upcast
        # temporaries + double buffers).  Two TCs -> want >= 2 batch tiles.
        return dict(b_cap=512, d_cap=2048, vmem=40 * 1024 * 1024,
                    min_batch_tiles=2)
    # v5e / v6e: 512x1024 already sits near the HBM roofline; bigger tiles
    # only add fill latency and VMEM pressure.  Explicit 32 MiB override
    # (v5e's scoped default is only 16 MiB).
    return dict(b_cap=512, d_cap=1024, vmem=32 * 1024 * 1024,
                min_batch_tiles=1)


def contrastive_loss(output1, output2, labels, margin=1.0, batch_size=None):
    """output1, output2: (B, D) float; labels: (B,) 0/1. Returns scalar f32.

    `batch_size` is accepted for signature parity with the PyTorch module but
    is unused by the math (as in the original)."""
    assert output1.shape == output2.shape, "embedding shapes must match"
    B, D = output1.shape
    in_dtype = output1.dtype

    cfg = _tpu_config()
    sub = _sublane_unit(in_dtype)

    # --- batch tiling: pad B to the dtype's sublane unit --------------------
    B_pad = _round_up(B, sub)
    b_cap = cfg["b_cap"]
    if cfg["min_batch_tiles"] > 1 and B_pad >= cfg["min_batch_tiles"] * sub:
        # v7x: force >= 2 batch tiles so the "parallel" axis shards across
        # both TensorCores.
        b_cap = min(b_cap,
                    max(sub, (B_pad // cfg["min_batch_tiles"]) // sub * sub))
    tb = _pick_divisor_tile(B_pad, sub, b_cap)

    # --- feature tiling: pad D to a lane multiple (zeros are exact) ---------
    D_pad = _round_up(D, _LANES)
    td = _pick_divisor_tile(D_pad, _LANES, cfg["d_cap"])
    lane_groups = td // _LANES

    # --- pad operands (zero-padding is exact for dot / squared norms) -------
    if (B_pad, D_pad) != (B, D):
        x = jnp.pad(output1, ((0, B_pad - B), (0, D_pad - D)))
        y = jnp.pad(output2, ((0, B_pad - B), (0, D_pad - D)))
    else:
        x, y = output1, output2
    lab = labels.reshape(B).astype(jnp.float32)
    if B_pad != B:
        lab = jnp.pad(lab, (0, B_pad - B))
    lab2 = lab.reshape(B_pad, 1)

    grid = (B_pad // tb, D_pad // td)

    cost = pl.CostEstimate(
        flops=6 * B_pad * D_pad,                 # 3 muls + 3 adds per element
        transcendentals=B_pad,                   # one rsqrt per row
        bytes_accessed=(2 * B_pad * D_pad * jnp.dtype(in_dtype).itemsize
                        + 8 * B_pad),            # labels + per-row output
    )

    kernel = functools.partial(_contrastive_kernel, margin=float(margin),
                               lane_groups=lane_groups)
    per_row = pl.pallas_call(
        kernel,
        out_shape=jax.ShapeDtypeStruct((B_pad, 1), jnp.float32),
        grid_spec=pltpu.PrefetchScalarGridSpec(
            num_scalar_prefetch=0,
            grid=grid,
            in_specs=[
                pl.BlockSpec((tb, td), lambda b, k: (b, k)),
                pl.BlockSpec((tb, td), lambda b, k: (b, k)),
                pl.BlockSpec((tb, 1), lambda b, k: (b, 0)),
            ],
            out_specs=pl.BlockSpec((tb, 1), lambda b, k: (b, 0)),
            scratch_shapes=[
                pltpu.VMEM((tb, _LANES), jnp.float32),   # dot accumulator
                pltpu.VMEM((tb, _LANES), jnp.float32),   # ||x||^2 accumulator
                pltpu.VMEM((tb, _LANES), jnp.float32),   # ||y||^2 accumulator
            ],
        ),
        compiler_params=pltpu.CompilerParams(
            dimension_semantics=("parallel", "arbitrary"),
            vmem_limit_bytes=cfg["vmem"],
        ),
        cost_estimate=cost,
    )(x, y, lab2)

    # Tiny (B,) -> scalar reduction in XLA; padded rows are excluded.
    return jnp.sum(per_row[:B, 0])


def _reference_loss(output1, output2, labels, margin=1.0):
    """Pure-JAX reference replicating the PyTorch forward semantics."""
    x = output1.astype(jnp.float32)
    y = output2.astype(jnp.float32)
    eps = 1e-8
    dot = jnp.sum(x * y, axis=-1)
    denom = jnp.maximum(jnp.linalg.norm(x, axis=-1) * jnp.linalg.norm(y, axis=-1), eps)
    dist = 1.0 - dot / denom
    lab = labels.astype(jnp.float32)
    hinge = jnp.maximum(margin - dist, 0.0)
    return jnp.sum(0.5 * (lab * dist * dist + (1.0 - lab) * hinge * hinge))


if __name__ == "__main__":
    key = jax.random.PRNGKey(0)
    k1, k2 = jax.random.split(key)
    B, D = 8, 32                       # batch=8, hidden=32
    output1 = jax.random.normal(k1, (B, D), dtype=jnp.float32)
    output2 = jax.random.normal(k2, (B, D), dtype=jnp.float32)
    labels = jnp.array([1, 0, 1, 0, 1, 1, 0, 0], dtype=jnp.int32)

    # f32 path (also exercises the D -> 128 zero-padding path).
    loss = contrastive_loss(output1, output2, labels, margin=1.0)
    loss = jax.block_until_ready(loss)
    ref = _reference_loss(output1, output2, labels, margin=1.0)
    np.testing.assert_allclose(np.asarray(loss), np.asarray(ref),
                               rtol=1e-5, atol=1e-5)

    # bf16 path (exercises the 16-row sublane unit and batch padding).
    o1b = output1.astype(jnp.bfloat16)
    o2b = output2.astype(jnp.bfloat16)
    loss_bf = jax.block_until_ready(
        contrastive_loss(o1b, o2b, labels, margin=1.0))
    ref_bf = _reference_loss(o1b, o2b, labels, margin=1.0)
    np.testing.assert_allclose(np.asarray(loss_bf), np.asarray(ref_bf),
                               rtol=1e-4, atol=1e-4)

    print("KERNEL_OK")
</pallas_src>

<mosaic_0001>
module attributes {stable_mosaic.version = 11 : i64} {
  func.func @_contrastive_kernel(%arg0: i32, %arg1: i32, %arg2: memref<8x128xf32, #tpu.memory_space<vmem>>, %arg3: memref<8x128xf32, #tpu.memory_space<vmem>>, %arg4: memref<8x1xf32, #tpu.memory_space<vmem>>, %arg5: memref<8x1xf32, #tpu.memory_space<vmem>>, %arg6: memref<8x128xf32, #tpu.memory_space<vmem>>, %arg7: memref<8x128xf32, #tpu.memory_space<vmem>>, %arg8: memref<8x128xf32, #tpu.memory_space<vmem>>) attributes {dimension_semantics = [#tpu.dimension_semantics<parallel>, #tpu.dimension_semantics<arbitrary>], iteration_bounds = array<i64: 1, 1>, scalar_prefetch = 0 : i64, scratch_operands = 3 : i64, tpu.core_type = #tpu.core_type<tc>, window_params = [{transform_indices = @transform_0, window_bounds = array<i64: 8, 128>}, {transform_indices = @transform_1, window_bounds = array<i64: 8, 128>}, {transform_indices = @transform_2, window_bounds = array<i64: 8, 1>}, {transform_indices = @transform_3, window_bounds = array<i64: 8, 1>}]} {
    %c0_i32 = arith.constant 0 : i32
    %0 = arith.cmpi eq, %arg1, %c0_i32 : i32
    %1 = arith.extui %0 : i1 to i32
    %c0_i32_0 = arith.constant 0 : i32
    %2 = arith.cmpi ne, %1, %c0_i32_0 : i32
    scf.if %2 {
      %cst = arith.constant 0.000000e+00 : f32
      %20 = vector.broadcast %cst : f32 to vector<8x128xf32>
      %c0_18 = arith.constant 0 : index
      %c0_19 = arith.constant 0 : index
      %21 = vector.load %arg6[%c0_18, %c0_19] : memref<8x128xf32, #tpu.memory_space<vmem>>, vector<8x128xf32>
      tpu.vector_store %arg6[%c0_18, %c0_19], %20 {strides = array<i32>} : memref<8x128xf32, #tpu.memory_space<vmem>>, vector<8x128xf32>,
      %cst_20 = arith.constant 0.000000e+00 : f32
      %22 = vector.broadcast %cst_20 : f32 to vector<8x128xf32>
      %c0_21 = arith.constant 0 : index
      %c0_22 = arith.constant 0 : index
      %23 = vector.load %arg7[%c0_21, %c0_22] : memref<8x128xf32, #tpu.memory_space<vmem>>, vector<8x128xf32>
      tpu.vector_store %arg7[%c0_21, %c0_22], %22 {strides = array<i32>} : memref<8x128xf32, #tpu.memory_space<vmem>>, vector<8x128xf32>,
      %cst_23 = arith.constant 0.000000e+00 : f32
      %24 = vector.broadcast %cst_23 : f32 to vector<8x128xf32>
      %c0_24 = arith.constant 0 : index
      %c0_25 = arith.constant 0 : index
      %25 = vector.load %arg8[%c0_24, %c0_25] : memref<8x128xf32, #tpu.memory_space<vmem>>, vector<8x128xf32>
      tpu.vector_store %arg8[%c0_24, %c0_25], %24 {strides = array<i32>} : memref<8x128xf32, #tpu.memory_space<vmem>>, vector<8x128xf32>,
    } else {
    }
    %c0 = arith.constant 0 : index
    %c0_1 = arith.constant 0 : index
    %3 = vector.load %arg2[%c0, %c0_1] : memref<8x128xf32, #tpu.memory_space<vmem>>, vector<8x128xf32>
    %c0_2 = arith.constant 0 : index
    %c0_3 = arith.constant 0 : index
    %4 = vector.load %arg3[%c0_2, %c0_3] : memref<8x128xf32, #tpu.memory_space<vmem>>, vector<8x128xf32>
    %5 = arith.mulf %3, %4 : vector<8x128xf32>
    %6 = arith.mulf %3, %3 : vector<8x128xf32>
    %7 = arith.mulf %4, %4 : vector<8x128xf32>
    %c0_4 = arith.constant 0 : index
    %c0_5 = arith.constant 0 : index
    %8 = vector.load %arg6[%c0_4, %c0_5] : memref<8x128xf32, #tpu.memory_space<vmem>>, vector<8x128xf32>
    %9 = arith.addf %8, %5 : vector<8x128xf32>
    %c0_6 = arith.constant 0 : index
    %c0_7 = arith.constant 0 : index
    %10 = vector.load %arg6[%c0_6, %c0_7] : memref<8x128xf32, #tpu.memory_space<vmem>>, vector<8x128xf32>
    tpu.vector_store %arg6[%c0_6, %c0_7], %9 {strides = array<i32>} : memref<8x128xf32, #tpu.memory_space<vmem>>, vector<8x128xf32>,
    %c0_8 = arith.constant 0 : index
    %c0_9 = arith.constant 0 : index
    %11 = vector.load %arg7[%c0_8, %c0_9] : memref<8x128xf32, #tpu.memory_space<vmem>>, vector<8x128xf32>
    %12 = arith.addf %11, %6 : vector<8x128xf32>
    %c0_10 = arith.constant 0 : index
    %c0_11 = arith.constant 0 : index
    %13 = vector.load %arg7[%c0_10, %c0_11] : memref<8x128xf32, #tpu.memory_space<vmem>>, vector<8x128xf32>
    tpu.vector_store %arg7[%c0_10, %c0_11], %12 {strides = array<i32>} : memref<8x128xf32, #tpu.memory_space<vmem>>, vector<8x128xf32>,
    %c0_12 = arith.constant 0 : index
    %c0_13 = arith.constant 0 : index
    %14 = vector.load %arg8[%c0_12, %c0_13] : memref<8x128xf32, #tpu.memory_space<vmem>>, vector<8x128xf32>
    %15 = arith.addf %14, %7 : vector<8x128xf32>
    %c0_14 = arith.constant 0 : index
    %c0_15 = arith.constant 0 : index
    %16 = vector.load %arg8[%c0_14, %c0_15] : memref<8x128xf32, #tpu.memory_space<vmem>>, vector<8x128xf32>
    tpu.vector_store %arg8[%c0_14, %c0_15], %15 {strides = array<i32>} : memref<8x128xf32, #tpu.memory_space<vmem>>, vector<8x128xf32>,
    %c0_i32_16 = arith.constant 0 : i32
    %17 = arith.cmpi eq, %arg1, %c0_i32_16 : i32
    %18 = arith.extui %17 : i1 to i32
    %c0_i32_17 = arith.constant 0 : i32
    %19 = arith.cmpi ne, %18, %c0_i32_17 : i32
    scf.if %19 {
      %c0_18 = arith.constant 0 : index
      %c0_19 = arith.constant 0 : index
      %20 = vector.load %arg6[%c0_18, %c0_19] : memref<8x128xf32, #tpu.memory_space<vmem>>, vector<8x128xf32>
      %cst = arith.constant dense<0.000000e+00> : vector<8xf32>
      %21 = vector.multi_reduction <add>, %20, %cst [1] : vector<8x128xf32> to vector<8xf32>
      %22 = vector.shape_cast %21 : vector<8xf32> to vector<8x1xf32>
      %c0_20 = arith.constant 0 : index
      %c0_21 = arith.constant 0 : index
      %23 = vector.load %arg7[%c0_20, %c0_21] : memref<8x128xf32, #tpu.memory_space<vmem>>, vector<8x128xf32>
      %cst_22 = arith.constant dense<0.000000e+00> : vector<8xf32>
      %24 = vector.multi_reduction <add>, %23, %cst_22 [1] : vector<8x128xf32> to vector<8xf32>
      %25 = vector.shape_cast %24 : vector<8xf32> to vector<8x1xf32>
      %c0_23 = arith.constant 0 : index
      %c0_24 = arith.constant 0 : index
      %26 = vector.load %arg8[%c0_23, %c0_24] : memref<8x128xf32, #tpu.memory_space<vmem>>, vector<8x128xf32>
      %cst_25 = arith.constant dense<0.000000e+00> : vector<8xf32>
      %27 = vector.multi_reduction <add>, %26, %cst_25 [1] : vector<8x128xf32> to vector<8xf32>
      %28 = vector.shape_cast %27 : vector<8xf32> to vector<8x1xf32>
      %29 = arith.mulf %25, %28 : vector<8x1xf32>
      %cst_26 = arith.constant 9.99999993E-9 : f32
      %cst_27 = arith.constant 9.99999993E-9 : f32
      %30 = arith.mulf %cst_26, %cst_27 : f32
      %31 = vector.broadcast %30 : f32 to vector<8x1xf32>
      %32 = arith.maximumf %29, %31 : vector<8x1xf32>
      %33 = math.rsqrt %32 : vector<8x1xf32>
      %34 = arith.mulf %22, %33 : vector<8x1xf32>
      %cst_28 = arith.constant 1.000000e+00 : f32
      %35 = vector.broadcast %cst_28 : f32 to vector<8x1xf32>
      %36 = arith.subf %35, %34 : vector<8x1xf32>
      %c0_29 = arith.constant 0 : index
      %c0_30 = arith.constant 0 : index
      %37 = vector.load %arg4[%c0_29, %c0_30] : memref<8x1xf32, #tpu.memory_space<vmem>>, vector<8x1xf32>
      %cst_31 = arith.constant 1.000000e+00 : f32
      %38 = vector.broadcast %cst_31 : f32 to vector<8x1xf32>
      %39 = arith.subf %38, %36 : vector<8x1xf32>
      %cst_32 = arith.constant 0.000000e+00 : f32
      %40 = vector.broadcast %cst_32 : f32 to vector<8x1xf32>
      %41 = arith.maximumf %39, %40 : vector<8x1xf32>
      %42 = arith.mulf %37, %36 : vector<8x1xf32>
      %43 = arith.mulf %42, %36 : vector<8x1xf32>
      %cst_33 = arith.constant 1.000000e+00 : f32
      %44 = vector.broadcast %cst_33 : f32 to vector<8x1xf32>
      %45 = arith.subf %44, %37 : vector<8x1xf32>
      %46 = arith.mulf %45, %41 : vector<8x1xf32>
      %47 = arith.mulf %46, %41 : vector<8x1xf32>
      %48 = arith.addf %43, %47 : vector<8x1xf32>
      %cst_34 = arith.constant 5.000000e-01 : f32
      %49 = vector.broadcast %cst_34 : f32 to vector<8x1xf32>
      %50 = arith.mulf %49, %48 : vector<8x1xf32>
      %c0_35 = arith.constant 0 : index
      %c0_36 = arith.constant 0 : index
      %51 = vector.load %arg5[%c0_35, %c0_36] : memref<8x1xf32, #tpu.memory_space<vmem>>, vector<8x1xf32>
      tpu.vector_store %arg5[%c0_35, %c0_36], %50 {strides = array<i32>} : memref<8x1xf32, #tpu.memory_space<vmem>>, vector<8x1xf32>,
    } else {
    }
    return
  }
  func.func @transform_0(%arg0: i32, %arg1: i32) -> (i32, i32) {
    %c0_i32 = arith.constant 0 : i32
    return %arg0, %arg1 : i32, i32
  }
  func.func @transform_1(%arg0: i32, %arg1: i32) -> (i32, i32) {
    %c0_i32 = arith.constant 0 : i32
    return %arg0, %arg1 : i32, i32
  }
  func.func @transform_2(%arg0: i32, %arg1: i32) -> (i32, i32) {
    %c0_i32 = arith.constant 0 : i32
    %c0_i32_0 = arith.constant 0 : i32
    return %arg0, %c0_i32 : i32, i32
  }
  func.func @transform_3(%arg0: i32, %arg1: i32) -> (i32, i32) {
    %c0_i32 = arith.constant 0 : i32
    %c0_i32_0 = arith.constant 0 : i32
    return %arg0, %c0_i32 : i32, i32
  }
}

</mosaic_0001>

<llo_original>
// kernel: tpu_custom_call.1
$region0: #{tpu_custom_call.1}
  #allocation0 [shape = 'u32[]', space=smem, size = 0x4, offset = 0x4, fixed_abs, tag = 'smem constant byte address 0x4 - core index']
  #allocation1 [shape = 'u32[144,128]{1,0:T(1,128)}', space=vmem, size = 0x12000, scoped, tag = 'internal scratch']
  #allocation2 [shape = 'f32[8,128]{1,0:T(8,128)}', space=vmem, size = 0x1000, scoped, tag = 'scratch operand']
  #allocation3 [shape = 'f32[8,128]{1,0:T(8,128)}', space=vmem, size = 0x1000, scoped, tag = 'scratch operand']
  #allocation4 [shape = 'f32[8,128]{1,0:T(8,128)}', space=vmem, size = 0x1000, scoped, tag = 'scratch operand']
  %s0 = inlined_call_operand.vmem [shape: f32[8,128], index: 0, kind: input, shape index: {}]
  %s1 = inlined_call_operand.hbm [shape: f32[8,128], index: 1, kind: input, shape index: {}]
  %s2 = inlined_call_operand.vmem [shape: f32[8,1], index: 2, kind: input, shape index: {}]
  %s3 = inlined_call_operand.vmem [shape: f32[8,1], index: 3, kind: output, shape index: {}]
  %s4 = sld [smem:[#allocation0]]
  $region34: #{tpu_custom_call.1} parent=0
    _
  %s6 = ssub.s32 1, %s4
  %s7 = scalar_select 0, %s6, %s4
  $region1: #{tpu_custom_call.1} parent=0
    #allocation5 [shape = 'u8[4096]{0}', space=vmem, size = 0x1000, scoped, tag = 'input window, operand 1, single buffered']
    #allocation6 [shape = 's32[1]{0}', space=sflag, size = 0x4, scoped, tag = 'scoped memory for tpu_custom_call.1']
    %8 = vsyncpa [#allocation6], 0
    // Predicated region
    $region2: #{tpu_custom_call.1} parent=1 // pred_check
      _
    $region3: #{tpu_custom_call.1} parent=1 // pred_check_branch
      %10 = sbr.rel (0) target = $region5
    $region4: #{tpu_custom_call.1} parent=1 // pred_region
      _
    $region5: #{tpu_custom_call.1} parent=1 // pred_fallthru
      _
    // Predicated region
    $region6: #{tpu_custom_call.1} parent=1 // pred_check
      _
    $region7: #{tpu_custom_call.1} parent=1 // pred_check_branch
      %12 = sbr.rel (0) target = $region9
    $region8: #{tpu_custom_call.1} parent=1 // pred_region
      %s14 = ssub.s32 128, 128
      %15 = vsyncadd [#allocation6], %s14
      %s17 = sshll.u32 [#allocation5], 4
      %s18 = int_to_ptr.vmem [resolvable:$true] %s17
      %20 = dma.hbm_to_vmem [thread:$0]  %s1, 128, %s18, [#allocation6]
    $region9: #{tpu_custom_call.1} parent=1 // pred_fallthru
      _
    // Predicated region
    $region10: #{tpu_custom_call.1} parent=1 // pred_check
      _
    $region11: #{tpu_custom_call.1} parent=1 // pred_check_branch
      %22 = sbr.rel (0) target = $region13
    $region12: #{tpu_custom_call.1} parent=1 // pred_region
      _
    $region13: #{tpu_custom_call.1} parent=1 // pred_fallthru
      _
    // Predicated region
    $region14: #{tpu_custom_call.1} parent=1 // pred_check
      _
    $region15: #{tpu_custom_call.1} parent=1 // pred_check_branch
      %24 = sbr.rel (0) target = $region17
    $region16: #{tpu_custom_call.1} parent=1 // pred_region
      %25 = dma.done [#allocation6], 128
    $region17: #{tpu_custom_call.1} parent=1 // pred_fallthru
      _
    %p26 = scmp.eq.s32.totalorder 0, 0
    // Predicated region
    $region18: #{tpu_custom_call.1} parent=1 // pred_check
      %p27 = pneg %p26
    $region19: #{tpu_custom_call.1} parent=1 // pred_check_branch
      %29 = sbr.rel (%p27) target = $region21
    $region20: #{tpu_custom_call.1} parent=1 // pred_region
      %30 = vst [vmem:[#allocation2] sm:$0xff] 0.0
      %31 = vst [vmem:[#allocation3] sm:$0xff] 0.0
      %32 = vst [vmem:[#allocation4] sm:$0xff] 0.0
    $region21: #{tpu_custom_call.1} parent=1 // pred_fallthru
      _
    %v33 = vld [vmem:[%s0] sm:$0xff]
    %v34 = vld [vmem:[#allocation5] sm:$0xff]
    %v35 = vmul.f32 %v33, %v34
    %v36 = vmul.f32 %v33, %v33
    %v37 = vmul.f32 %v34, %v34
    %v38 = vld [vmem:[#allocation2] sm:$0xff]
    %v39 = vadd.f32 %v38, %v35
    %40 = vst [vmem:[#allocation2] sm:$0xff] %v39
    %v41 = vld [vmem:[#allocation3] sm:$0xff]
    %v42 = vadd.f32 %v41, %v36
    %43 = vst [vmem:[#allocation3] sm:$0xff] %v42
    %v44 = vld [vmem:[#allocation4] sm:$0xff]
    %v45 = vadd.f32 %v44, %v37
    %46 = vst [vmem:[#allocation4] sm:$0xff] %v45
    // Predicated region
    $region22: #{tpu_custom_call.1} parent=1 // pred_check
      %p47 = pneg %p26
    $region23: #{tpu_custom_call.1} parent=1 // pred_check_branch
      %49 = sbr.rel (%p47) target = $region25
    $region24: #{tpu_custom_call.1} parent=1 // pred_region
      %v50 = vld [vmem:[#allocation2] sm:$0xff]
      %51 = vadd.xlane.f32.xlu0 %v50
      %v52 = vpop.xlane.xlu0 %51
      %v53 = vld [vmem:[#allocation3] sm:$0xff]
      %54 = vadd.xlane.f32.xlu0 %v53
      %v55 = vpop.xlane.xlu0 %54
      %v56 = vld [vmem:[#allocation4] sm:$0xff]
      %57 = vadd.xlane.f32.xlu0 %v56
      %v58 = vpop.xlane.xlu0 %57
      %v59 = vmul.f32 %v55, %v58
      %v60 = vmax.f32 %v59, 1e-16
      %v61 = vrsqrt.pop %v60
      %v62 = vmul.f32 %v52, %v61
      %v63 = vsub.f32 1.0, %v62
      %v64 = vld [vmem:[%s2] sm:$0xff]
      %v65 = vsub.f32 1.0, %v63
      %v66 = vmax.f32 %v65, 0.0
      %v67 = vmul.f32 %v64, %v63
      %v68 = vmul.f32 %v67, %v63
      %v69 = vsub.f32 1.0, %v64
      %v70 = vmul.f32 %v69, %v66
      %v71 = vmul.f32 %v70, %v66
      %v72 = vadd.f32 %v68, %v71
      %v73 = vmul.f32 %v72, 0.5
      %vm74 = vcmask 7168
      %75 = vst.msk [vmem:[%s3] sm:$0xff] %vm74, %v73
    $region25: #{tpu_custom_call.1} parent=1 // pred_fallthru
      _
    // Predicated region
    $region26: #{tpu_custom_call.1} parent=1 // pred_check
      _
    $region27: #{tpu_custom_call.1} parent=1 // pred_check_branch
      %77 = sbr.rel (0) target = $region29
    $region28: #{tpu_custom_call.1} parent=1 // pred_region
      _
    $region29: #{tpu_custom_call.1} parent=1 // pred_fallthru
      _
    // Predicated region
    $region30: #{tpu_custom_call.1} parent=1 // pred_check
      _
    $region31: #{tpu_custom_call.1} parent=1 // pred_check_branch
      %79 = sbr.rel (0) target = $region33
    $region32: #{tpu_custom_call.1} parent=1 // pred_region
      _
    $region33: #{tpu_custom_call.1} parent=1 // pred_fallthru
      _
    %80 = vsyncpa [#allocation6], 1

</llo_original>
